<compile_context>
chip_gen: v6e
topology: v6e:2x2x1
jax: 0.10.0
libtpu: 0.0.40
codegen_flags: <defaults>
</compile_context>

<pallas_src>
import functools

import jax
import jax.numpy as jnp
from jax.experimental import pallas as pl
from jax.experimental.pallas import tpu as pltpu

COUNT = 8  # fixed 8x8 patch grid, as in the torch module

# Shapes at or below this stay fully unrolled; larger ones use bounded
# fori_loops so the live set does not spill past the 64 vregs.
_UNROLL_LIMIT = 16


def _round_up(a: int, b: int) -> int:
    return (a + b - 1) // b * b


def _r8(v: int) -> int:
    return _round_up(v, 8)


def _tpu_config():
    """Per-generation VMEM budget, scoped-VMEM limit and TensorCore count."""
    vmem_phys = None
    kind = ""
    try:
        vmem_phys = int(pltpu.get_tpu_info().vmem_capacity_bytes)
    except Exception:
        pass
    try:
        kind = jax.devices()[0].device_kind.lower()
    except Exception:
        pass
    if vmem_phys is None:
        vmem_phys = (128 if ("v5" in kind or "v6" in kind) else 64) * 1024 * 1024
    multi_tc = ("v7" in kind) or vmem_phys <= 80 * 1024 * 1024
    if multi_tc:
        # v7x: 64 MiB physical VMEM (32 MiB scoped) and 2 TensorCores.
        return 12 * 1024 * 1024, 32 * 1024 * 1024, 2
    # v5e / v6e: 128 MiB physical VMEM, single TensorCore -> big lane tiles.
    return 24 * 1024 * 1024, 64 * 1024 * 1024, 1


def _per_lane_vmem_bytes(c: int, p: int, itemsize: int) -> int:
    """Worst-case VMEM bytes one lane (patch) keeps live in a grid step.

    Every sublane dimension is ceiled to 8 (the (8,128) tile padding) and all
    simultaneously-live f32 intermediates are counted separately.
    """
    # Double-buffered input block + double-buffered output block.
    blocks = 2 * 2 * c * _r8(p) * itemsize
    f32_rows = (
        2 * c * _r8(p)      # x (and its transposed view on the fori path)
        + 2 * c * _r8(c)    # energy/neg_e and wT
        + c * _r8(p)        # acc
        + 4 * _r8(c)        # m, denom, reciprocal, scale
    )
    return blocks + 4 * f32_rows


def _choose_tile_n(n: int, c: int, p: int, itemsize: int,
                   budget: int, num_tc: int) -> int:
    """Patches (lanes) per grid step: a multiple of 128, VMEM- and TC-aware."""
    n128 = _round_up(n, 128)
    per_lane = _per_lane_vmem_bytes(c, p, itemsize)
    cap = max(128, budget // per_lane // 128 * 128)
    tn = min(n128, cap)
    if num_tc > 1 and n128 >= num_tc * 128:
        # Multi-TensorCore chips (v7x): at least one grid step per core,
        # preferably two, so "parallel" sharding keeps both cores busy.
        # On v5e/v6e (1 TC) we never split: fewer, longer steps win.
        want_steps = 2 * num_tc if n128 >= 2 * num_tc * 128 else num_tc
        tn = min(tn, max(128, (n128 // want_steps) // 128 * 128))
    return tn


def _spectral_block_kernel(x_ref, gamma_ref, o_ref, *, unroll_loops):
    # x_ref / o_ref: (C, P, TN) VMEM blocks, patches on the lane axis.
    # gamma_ref: (1,) SMEM scalar.
    C, P, TN = x_ref.shape
    x = x_ref[...].astype(jnp.float32)                        # (C, P, TN)

    # energy[i, j, n] = sum_p x[i, p, n] * x[j, p, n]   (VPU, lanes = patches)
    if unroll_loops:
        x0 = x[:, 0, :]
        energy = x0[:, None, :] * x0[None, :, :]              # (C, C, TN)
        for p in range(1, P):
            xp_ = x[:, p, :]
            energy = energy + xp_[:, None, :] * xp_[None, :, :]
    else:
        # Large P: bounded loop (static Python unrolling would not bound the
        # live ranges) with the looped index on the leading (untiled) axis.
        xT = jnp.transpose(x, (1, 0, 2))                      # (P, C, TN)

        def energy_body(pi, en):
            xp_ = jax.lax.dynamic_index_in_dim(xT, pi, axis=0, keepdims=False)
            return en + xp_[:, None, :] * xp_[None, :, :]

        energy = jax.lax.fori_loop(0, P, energy_body,
                                   jnp.zeros((C, C, TN), jnp.float32),
                                   unroll=8)
    # TODO(synk): for C, P >= ~64 this VPU formulation should switch to a
    # per-patch MXU matmul with a j-blocked softmax to bound the (C, C, TN)
    # live set (the MXU crossover comes early on v6e/v7x at 918/996 TF/s).

    # softmax(rowmax(E) - E) == softmax(-E), and E is *exactly* symmetric as
    # computed, so both the stabilizing row max and the row sum can be taken
    # over the leading axis (plain VALU tile ops, no cross-sublane reduce).
    # wT[j, i, n] = exp(-E[i, j, n] - m[i, n]) is the transposed weight
    # matrix, so the accumulation below only ever indexes leading axes.
    neg_e = -energy
    m = jnp.max(neg_e, axis=0)                                 # (C, TN)
    wT = jnp.exp(neg_e - m[None, :, :])                        # (C, C, TN)
    denom = jnp.sum(wT, axis=0)                                # (C, TN)

    # acc[i, p, n] = sum_j wT[j, i, n] * x[j, p, n]
    if unroll_loops:
        acc = wT[0][:, None, :] * x[0][None, :, :]             # (C, P, TN)
        for j in range(1, C):
            acc = acc + wT[j][:, None, :] * x[j][None, :, :]
    else:
        def acc_body(j, a):
            wj = jax.lax.dynamic_index_in_dim(wT, j, axis=0, keepdims=False)
            xj = x_ref[j].astype(jnp.float32)   # in-loop ref load keeps the
            return a + wj[:, None, :] * xj[None, :, :]          # live set small

        acc = jax.lax.fori_loop(0, C, acc_body,
                                jnp.zeros((C, P, TN), jnp.float32),
                                unroll=4)

    # Fold softmax normalization and (1 + gamma) into one per-row scale.
    # EUP approximate reciprocal + one Newton step keeps full f32 accuracy.
    r = pl.reciprocal(denom, approx=True)
    r = r * (2.0 - denom * r)
    scale = (1.0 + gamma_ref[0]) * r                           # (C, TN)
    o_ref[...] = (acc * scale[:, None, :]).astype(o_ref.dtype)


def spectral_agg(x, gamma):
    """x: (B, C, H, W) with H == W and H % 8 == 0.  gamma: (1,) float."""
    B, C, H, W = x.shape
    assert H == W and H % COUNT == 0
    s = H // COUNT
    P = s * s
    N = B * COUNT * COUNT

    # Patches-on-lanes layout (C, P, N): p = u*s + v, n = b*64 + m*8 + n_idx.
    # allow_input_fusion below lets XLA fuse this transpose (and the pad) into
    # the pallas_call input instead of materializing an extra HBM round trip.
    x6 = x.reshape(B, C, COUNT, s, COUNT, s)
    xp = jnp.transpose(x6, (1, 3, 5, 0, 2, 4)).reshape(C, P, N)

    budget, vmem_limit, num_tc = _tpu_config()
    tn = _choose_tile_n(N, C, P, x.dtype.itemsize, budget, num_tc)
    n_pad = _round_up(N, tn)
    if n_pad != N:
        # Zero patches are harmless: energy=0 -> uniform softmax -> output 0.
        xp = jnp.pad(xp, ((0, 0), (0, 0), (0, n_pad - N)))

    kernel = functools.partial(
        _spectral_block_kernel,
        unroll_loops=(C <= _UNROLL_LIMIT and P <= _UNROLL_LIMIT))

    out = pl.pallas_call(
        kernel,
        out_shape=jax.ShapeDtypeStruct((C, P, n_pad), x.dtype),
        grid_spec=pltpu.PrefetchScalarGridSpec(
            num_scalar_prefetch=0,
            grid=(n_pad // tn,),
            in_specs=[
                # (C, P) are full extents; tn is a multiple of 128 -> the
                # trailing (P, tn) dims satisfy the (8,128) rule and stores
                # are lane-dense.
                # TODO(synk): when both C < 8 and P < 8 (as in the tiny demo)
                # the (P, tn) tiles pad P up to 8 sublanes; a fully packed
                # (C*P, tn) 2-D block interface would remove that at the cost
                # of an in-kernel sublane-repacking reshape.
                pl.BlockSpec((C, P, tn), lambda i: (0, 0, i)),
                # gamma scalar lives in SMEM, passed whole.
                pl.BlockSpec(memory_space=pltpu.MemorySpace.SMEM),
            ],
            out_specs=pl.BlockSpec((C, P, tn), lambda i: (0, 0, i)),
        ),
        compiler_params=pltpu.CompilerParams(
            # TODO(synk): profile-verify that "parallel" shards the grid over
            # v7x's two TensorCores; otherwise switch to pltpu.CORE_PARALLEL.
            dimension_semantics=("parallel",),
            vmem_limit_bytes=vmem_limit,
            # One flag per input [xp, gamma]: allow XLA to fuse the transpose
            # and pad producing xp into this call's input.
            allow_input_fusion=[True, False],
        ),
        # input_output_aliases={0: 0} would also be legal (same shape/dtype,
        # block i is fully read before written) but is skipped so it cannot
        # inhibit the input fusion above.
    )(xp, gamma.astype(jnp.float32))

    # Undo the patch-major layout back to NCHW.
    # TODO(synk): this inverse transpose is still one extra HBM read+write; a
    # manual-DMA output path (memory_space=pl.ANY + strided make_async_copy of
    # the (s, s) sub-tiles) would remove it, but the tiny per-patch tiles make
    # those DMAs inefficient for small s, so it stays in XLA.
    out = out[:, :, :N]
    out = out.reshape(C, s, s, B, COUNT, COUNT)
    out = jnp.transpose(out, (3, 0, 4, 1, 5, 2)).reshape(B, C, H, W)
    return out


def spectral_agg_ref(x, gamma):
    """Pure-JAX reference mirroring the torch forward (incl. aliasing)."""
    B, C, H, W = x.shape
    s = H // COUNT
    P = s * s
    xp = x.reshape(B, C, COUNT, s, COUNT, s)
    xp = jnp.transpose(xp, (0, 2, 4, 1, 3, 5)).reshape(-1, C, P).astype(jnp.float32)
    energy = jnp.einsum("ncp,nkp->nck", xp, xp)
    e_new = jnp.max(energy, axis=-1, keepdims=True) - energy
    attn = jax.nn.softmax(e_new, axis=-1)
    out = jnp.einsum("nck,nkp->ncp", attn, xp)
    out = (1.0 + gamma[0]) * out
    out = out.reshape(B, COUNT, COUNT, C, s, s)
    out = jnp.transpose(out, (0, 3, 1, 4, 2, 5)).reshape(B, C, H, W)
    return out.astype(x.dtype)


if __name__ == "__main__":
    key = jax.random.PRNGKey(0)
    # B=2, C=4, H=W=16 -> stride=2, 8x8=64 patches of 4 pixels each, N=128.
    x = jax.random.normal(key, (2, 4, 16, 16), dtype=jnp.float32)
    # nn.Parameter(torch.zeros(1))
    gamma = jnp.zeros((1,), dtype=jnp.float32)

    out = spectral_agg(x, gamma)
    out = jax.block_until_ready(out)

    ref = spectral_agg_ref(x, gamma)
    assert out.shape == x.shape and out.dtype == x.dtype
    assert jnp.allclose(out, ref, atol=1e-4, rtol=1e-4), float(
        jnp.max(jnp.abs(out - ref)))

    print("KERNEL_OK")
</pallas_src>

<mosaic_0001>
module attributes {stable_mosaic.version = 11 : i64} {
  func.func @_spectral_block_kernel(%arg0: i32, %arg1: memref<4x4x128xf32, #tpu.memory_space<vmem>>, %arg2: memref<1xf32, #tpu.memory_space<smem>>, %arg3: memref<4x4x128xf32, #tpu.memory_space<vmem>>) attributes {dimension_semantics = [#tpu.dimension_semantics<parallel>], iteration_bounds = array<i64: 1>, scalar_prefetch = 0 : i64, scratch_operands = 0 : i64, tpu.core_type = #tpu.core_type<tc>, window_params = [{transform_indices = @transform_0, window_bounds = array<i64: 4, 4, 128>}, {transform_indices = @transform_1, window_bounds = array<i64: 1>}, {transform_indices = @transform_2, window_bounds = array<i64: 4, 4, 128>}]} {
    %c0 = arith.constant 0 : index
    %c0_0 = arith.constant 0 : index
    %c0_1 = arith.constant 0 : index
    %0 = vector.load %arg1[%c0, %c0_0, %c0_1] : memref<4x4x128xf32, #tpu.memory_space<vmem>>, vector<4x4x128xf32>
    %1 = vector.extract_strided_slice %0 {offsets = [0, 0, 0], sizes = [4, 1, 128], strides = [1, 1, 1]} : vector<4x4x128xf32> to vector<4x1x128xf32>
    %2 = vector.shape_cast %1 : vector<4x1x128xf32> to vector<4x128xf32>
    %3 = vector.shape_cast %2 : vector<4x128xf32> to vector<4x1x128xf32>
    %4 = vector.shape_cast %2 : vector<4x128xf32> to vector<1x4x128xf32>
    %5 = vector.broadcast %3 : vector<4x1x128xf32> to vector<4x4x128xf32>
    %6 = vector.broadcast %4 : vector<1x4x128xf32> to vector<4x4x128xf32>
    %7 = arith.mulf %5, %6 : vector<4x4x128xf32>
    %8 = vector.extract_strided_slice %0 {offsets = [0, 1, 0], sizes = [4, 1, 128], strides = [1, 1, 1]} : vector<4x4x128xf32> to vector<4x1x128xf32>
    %9 = vector.shape_cast %8 : vector<4x1x128xf32> to vector<4x128xf32>
    %10 = vector.shape_cast %9 : vector<4x128xf32> to vector<4x1x128xf32>
    %11 = vector.shape_cast %9 : vector<4x128xf32> to vector<1x4x128xf32>
    %12 = vector.broadcast %10 : vector<4x1x128xf32> to vector<4x4x128xf32>
    %13 = vector.broadcast %11 : vector<1x4x128xf32> to vector<4x4x128xf32>
    %14 = arith.mulf %12, %13 : vector<4x4x128xf32>
    %15 = arith.addf %7, %14 : vector<4x4x128xf32>
    %16 = vector.extract_strided_slice %0 {offsets = [0, 2, 0], sizes = [4, 1, 128], strides = [1, 1, 1]} : vector<4x4x128xf32> to vector<4x1x128xf32>
    %17 = vector.shape_cast %16 : vector<4x1x128xf32> to vector<4x128xf32>
    %18 = vector.shape_cast %17 : vector<4x128xf32> to vector<4x1x128xf32>
    %19 = vector.shape_cast %17 : vector<4x128xf32> to vector<1x4x128xf32>
    %20 = vector.broadcast %18 : vector<4x1x128xf32> to vector<4x4x128xf32>
    %21 = vector.broadcast %19 : vector<1x4x128xf32> to vector<4x4x128xf32>
    %22 = arith.mulf %20, %21 : vector<4x4x128xf32>
    %23 = arith.addf %15, %22 : vector<4x4x128xf32>
    %24 = vector.extract_strided_slice %0 {offsets = [0, 3, 0], sizes = [4, 1, 128], strides = [1, 1, 1]} : vector<4x4x128xf32> to vector<4x1x128xf32>
    %25 = vector.shape_cast %24 : vector<4x1x128xf32> to vector<4x128xf32>
    %26 = vector.shape_cast %25 : vector<4x128xf32> to vector<4x1x128xf32>
    %27 = vector.shape_cast %25 : vector<4x128xf32> to vector<1x4x128xf32>
    %28 = vector.broadcast %26 : vector<4x1x128xf32> to vector<4x4x128xf32>
    %29 = vector.broadcast %27 : vector<1x4x128xf32> to vector<4x4x128xf32>
    %30 = arith.mulf %28, %29 : vector<4x4x128xf32>
    %31 = arith.addf %23, %30 : vector<4x4x128xf32>
    %cst = arith.constant 0.000000e+00 : f32
    %32 = vector.broadcast %cst : f32 to vector<4x4x128xf32>
    %33 = arith.subf %32, %31 : vector<4x4x128xf32>
    %cst_2 = arith.constant dense<0xFF800000> : vector<4x128xf32>
    %34 = vector.multi_reduction <maximumf>, %33, %cst_2 [0] : vector<4x4x128xf32> to vector<4x128xf32>
    %35 = vector.shape_cast %34 : vector<4x128xf32> to vector<1x4x128xf32>
    %36 = vector.broadcast %35 : vector<1x4x128xf32> to vector<4x4x128xf32>
    %37 = arith.subf %33, %36 : vector<4x4x128xf32>
    %38 = math.exp %37 : vector<4x4x128xf32>
    %cst_3 = arith.constant dense<0.000000e+00> : vector<4x128xf32>
    %39 = vector.multi_reduction <add>, %38, %cst_3 [0] : vector<4x4x128xf32> to vector<4x128xf32>
    %40 = vector.extract_strided_slice %38 {offsets = [0, 0, 0], sizes = [1, 4, 128], strides = [1, 1, 1]} : vector<4x4x128xf32> to vector<1x4x128xf32>
    %41 = vector.shape_cast %40 : vector<1x4x128xf32> to vector<4x128xf32>
    %42 = vector.shape_cast %41 : vector<4x128xf32> to vector<4x1x128xf32>
    %43 = vector.extract_strided_slice %0 {offsets = [0, 0, 0], sizes = [1, 4, 128], strides = [1, 1, 1]} : vector<4x4x128xf32> to vector<1x4x128xf32>
    %44 = vector.shape_cast %43 : vector<1x4x128xf32> to vector<4x128xf32>
    %45 = vector.shape_cast %44 : vector<4x128xf32> to vector<1x4x128xf32>
    %46 = vector.broadcast %42 : vector<4x1x128xf32> to vector<4x4x128xf32>
    %47 = vector.broadcast %45 : vector<1x4x128xf32> to vector<4x4x128xf32>
    %48 = arith.mulf %46, %47 : vector<4x4x128xf32>
    %49 = vector.extract_strided_slice %38 {offsets = [1, 0, 0], sizes = [1, 4, 128], strides = [1, 1, 1]} : vector<4x4x128xf32> to vector<1x4x128xf32>
    %50 = vector.shape_cast %49 : vector<1x4x128xf32> to vector<4x128xf32>
    %51 = vector.shape_cast %50 : vector<4x128xf32> to vector<4x1x128xf32>
    %52 = vector.extract_strided_slice %0 {offsets = [1, 0, 0], sizes = [1, 4, 128], strides = [1, 1, 1]} : vector<4x4x128xf32> to vector<1x4x128xf32>
    %53 = vector.shape_cast %52 : vector<1x4x128xf32> to vector<4x128xf32>
    %54 = vector.shape_cast %53 : vector<4x128xf32> to vector<1x4x128xf32>
    %55 = vector.broadcast %51 : vector<4x1x128xf32> to vector<4x4x128xf32>
    %56 = vector.broadcast %54 : vector<1x4x128xf32> to vector<4x4x128xf32>
    %57 = arith.mulf %55, %56 : vector<4x4x128xf32>
    %58 = arith.addf %48, %57 : vector<4x4x128xf32>
    %59 = vector.extract_strided_slice %38 {offsets = [2, 0, 0], sizes = [1, 4, 128], strides = [1, 1, 1]} : vector<4x4x128xf32> to vector<1x4x128xf32>
    %60 = vector.shape_cast %59 : vector<1x4x128xf32> to vector<4x128xf32>
    %61 = vector.shape_cast %60 : vector<4x128xf32> to vector<4x1x128xf32>
    %62 = vector.extract_strided_slice %0 {offsets = [2, 0, 0], sizes = [1, 4, 128], strides = [1, 1, 1]} : vector<4x4x128xf32> to vector<1x4x128xf32>
    %63 = vector.shape_cast %62 : vector<1x4x128xf32> to vector<4x128xf32>
    %64 = vector.shape_cast %63 : vector<4x128xf32> to vector<1x4x128xf32>
    %65 = vector.broadcast %61 : vector<4x1x128xf32> to vector<4x4x128xf32>
    %66 = vector.broadcast %64 : vector<1x4x128xf32> to vector<4x4x128xf32>
    %67 = arith.mulf %65, %66 : vector<4x4x128xf32>
    %68 = arith.addf %58, %67 : vector<4x4x128xf32>
    %69 = vector.extract_strided_slice %38 {offsets = [3, 0, 0], sizes = [1, 4, 128], strides = [1, 1, 1]} : vector<4x4x128xf32> to vector<1x4x128xf32>
    %70 = vector.shape_cast %69 : vector<1x4x128xf32> to vector<4x128xf32>
    %71 = vector.shape_cast %70 : vector<4x128xf32> to vector<4x1x128xf32>
    %72 = vector.extract_strided_slice %0 {offsets = [3, 0, 0], sizes = [1, 4, 128], strides = [1, 1, 1]} : vector<4x4x128xf32> to vector<1x4x128xf32>
    %73 = vector.shape_cast %72 : vector<1x4x128xf32> to vector<4x128xf32>
    %74 = vector.shape_cast %73 : vector<4x128xf32> to vector<1x4x128xf32>
    %75 = vector.broadcast %71 : vector<4x1x128xf32> to vector<4x4x128xf32>
    %76 = vector.broadcast %74 : vector<1x4x128xf32> to vector<4x4x128xf32>
    %77 = arith.mulf %75, %76 : vector<4x4x128xf32>
    %78 = arith.addf %68, %77 : vector<4x4x128xf32>
    %79 = tpu.reciprocal %39 {approx = true} : vector<4x128xf32> -> vector<4x128xf32>
    %80 = arith.mulf %39, %79 : vector<4x128xf32>
    %cst_4 = arith.constant 2.000000e+00 : f32
    %81 = vector.broadcast %cst_4 : f32 to vector<4x128xf32>
    %82 = arith.subf %81, %80 : vector<4x128xf32>
    %83 = arith.mulf %79, %82 : vector<4x128xf32>
    %c0_5 = arith.constant 0 : index
    %84 = memref.load %arg2[%c0_5] : memref<1xf32, #tpu.memory_space<smem>>
    %cst_6 = arith.constant 1.000000e+00 : f32
    %85 = arith.addf %cst_6, %84 : f32
    %86 = vector.broadcast %85 : f32 to vector<4x128xf32>
    %87 = arith.mulf %86, %83 : vector<4x128xf32>
    %88 = vector.shape_cast %87 : vector<4x128xf32> to vector<4x1x128xf32>
    %89 = vector.broadcast %88 : vector<4x1x128xf32> to vector<4x4x128xf32>
    %90 = arith.mulf %78, %89 : vector<4x4x128xf32>
    %c0_7 = arith.constant 0 : index
    %c0_8 = arith.constant 0 : index
    %c0_9 = arith.constant 0 : index
    %91 = vector.load %arg3[%c0_7, %c0_8, %c0_9] : memref<4x4x128xf32, #tpu.memory_space<vmem>>, vector<4x4x128xf32>
    tpu.vector_store %arg3[%c0_7, %c0_8, %c0_9], %90 {strides = array<i32>} : memref<4x4x128xf32, #tpu.memory_space<vmem>>, vector<4x4x128xf32>,
    return
  }
  func.func @transform_0(%arg0: i32) -> (i32, i32, i32) {
    %c0_i32 = arith.constant 0 : i32
    %c0_i32_0 = arith.constant 0 : i32
    %c0_i32_1 = arith.constant 0 : i32
    return %c0_i32, %c0_i32_0, %arg0 : i32, i32, i32
  }
  func.func @transform_1(%arg0: i32) -> i32 {
    %c0_i32 = arith.constant 0 : i32
    %c0_i32_0 = arith.constant 0 : i32
    return %c0_i32 : i32
  }
  func.func @transform_2(%arg0: i32) -> (i32, i32, i32) {
    %c0_i32 = arith.constant 0 : i32
    %c0_i32_0 = arith.constant 0 : i32
    %c0_i32_1 = arith.constant 0 : i32
    return %c0_i32, %c0_i32_0, %arg0 : i32, i32, i32
  }
}

</mosaic_0001>

<llo_original>
// kernel: tpu_custom_call.1
$region0: #{tpu_custom_call.1}
  #allocation0 [shape = 'u32[]', space=smem, size = 0x4, offset = 0x4, fixed_abs, tag = 'smem constant byte address 0x4 - core index']
  #allocation1 [shape = 'u32[144,128]{1,0:T(1,128)}', space=vmem, size = 0x12000, scoped, tag = 'internal scratch']
  #allocation2 [shape = 'f32[1]{0:T(128)S(6)}', space=smem, size = 0x200, scoped, tag = 'scoped memory for tpu_custom_call.1']
  %s0 = inlined_call_operand.hbm [shape: f32[4,4,128], index: 0, kind: input, shape index: {}]
  %s1 = inlined_call_operand.<no memory space> [shape: f32[1], index: 1, kind: input, shape index: {}]
  %s2 = inlined_call_operand.hbm [shape: f32[4,4,128], index: 2, kind: output, shape index: {}]
  %s3 = sld [smem:[#allocation0]]
  $region22: #{tpu_custom_call.1} parent=0
    _
  %s5 = ssub.s32 1, %s3
  %s6 = scalar_select 0, %s5, %s3
  %7 = sst [smem:[#allocation2]] %s1
  $region1: #{tpu_custom_call.1} parent=0
    #allocation3 [shape = 'u8[8192]{0}', space=vmem, size = 0x2000, scoped, tag = 'input window, operand 0, single buffered']
    #allocation4 [shape = 's32[1]{0}', space=sflag, size = 0x4, scoped, tag = 'scoped memory for tpu_custom_call.1']
    #allocation5 [shape = 's32[1]{0}', space=sflag, size = 0x4, scoped, tag = 'scoped memory for tpu_custom_call.1']
    #allocation6 [shape = 'u8[8192]{0}', space=vmem, size = 0x2000, scoped, tag = 'output window, operand 0, single buffered']
    %8 = vsyncpa [#allocation4], 0
    %9 = vsyncpa [#allocation5], 0
    // Predicated region
    $region2: #{tpu_custom_call.1} parent=1 // pred_check
      _
    $region3: #{tpu_custom_call.1} parent=1 // pred_check_branch
      %11 = sbr.rel (0) target = $region5
    $region4: #{tpu_custom_call.1} parent=1 // pred_region
      %s13 = ssub.s32 256, 256
      %14 = vsyncadd [#allocation4], %s13
      %s15 = sshll.u32 [#allocation3], 4
      %s16 = int_to_ptr.vmem [resolvable:$true] %s15
      %21 = dma.hbm_to_vmem [thread:$0]  %s0, 256, %s16, [#allocation4], 64, 64, 4
    $region5: #{tpu_custom_call.1} parent=1 // pred_fallthru
      _
    // Predicated region
    $region6: #{tpu_custom_call.1} parent=1 // pred_check
      _
    $region7: #{tpu_custom_call.1} parent=1 // pred_check_branch
      %23 = sbr.rel (0) target = $region9
    $region8: #{tpu_custom_call.1} parent=1 // pred_region
      _
    $region9: #{tpu_custom_call.1} parent=1 // pred_fallthru
      _
    // Predicated region
    $region10: #{tpu_custom_call.1} parent=1 // pred_check
      _
    $region11: #{tpu_custom_call.1} parent=1 // pred_check_branch
      %25 = sbr.rel (0) target = $region13
    $region12: #{tpu_custom_call.1} parent=1 // pred_region
      %26 = dma.done [#allocation4], 256
    $region13: #{tpu_custom_call.1} parent=1 // pred_fallthru
      _
    %v27 = vld [vmem:[#allocation3] sm:$0xf]
    %v28 = vld [vmem:[#allocation3 + $0x4] sm:$0xf]
    %v29 = vld [vmem:[#allocation3 + $0x8] sm:$0xf]
    %v30 = vld [vmem:[#allocation3 + $0xc] sm:$0xf]
    %v31 = vlaneseq
    %v32 = vshrl.u32 %v31, 7
    %v33 = vsub.s32 0, %v32
    %v34 = vrot.slane %v27, %v33
    %v35 = vlaneseq
    %v36 = vshrl.u32 %v35, 7
    %v37 = vsub.s32 0, %v36
    %v38 = vrot.slane %v28, %v37
    %v39 = vlaneseq
    %v40 = vshrl.u32 %v39, 7
    %v41 = vsub.s32 0, %v40
    %v42 = vrot.slane %v29, %v41
    %v43 = vlaneseq
    %v44 = vshrl.u32 %v43, 7
    %v45 = vsub.s32 0, %v44
    %v46 = vrot.slane %v30, %v45
    %v51 = vrot.slane %v28, 7
    %vm52 = vcmask 1041409
    %v53 = vsel %vm52, %v51, %v27
    %v54 = vrot.slane %v29, 6
    %vm55 = vcmask 1042434
    %v56 = vsel %vm55, %v54, %v53
    %v57 = vrot.slane %v30, 5
    %vm58 = vcmask 1043459
    %v59 = vsel %vm58, %v57, %v56
    %v61 = vmul.f32 %v34, %v59
    %v62 = vmul.f32 %v38, %v59
    %v63 = vmul.f32 %v42, %v59
    %v64 = vmul.f32 %v46, %v59
    %v65 = vlaneseq
    %v66 = vshrl.u32 %v65, 7
    %v67 = vsub.s32 1, %v66
    %v68 = vrot.slane %v27, %v67
    %v69 = vlaneseq
    %v70 = vshrl.u32 %v69, 7
    %v71 = vsub.s32 1, %v70
    %v72 = vrot.slane %v28, %v71
    %v73 = vlaneseq
    %v74 = vshrl.u32 %v73, 7
    %v75 = vsub.s32 1, %v74
    %v76 = vrot.slane %v29, %v75
    %v77 = vlaneseq
    %v78 = vshrl.u32 %v77, 7
    %v79 = vsub.s32 1, %v78
    %v80 = vrot.slane %v30, %v79
    %v81 = vrot.slane %v27, 1
    %v82 = vsel %vm52, %v28, %v81
    %v83 = vrot.slane %v29, 7
    %v84 = vsel %vm55, %v83, %v82
    %v85 = vrot.slane %v30, 6
    %v86 = vsel %vm58, %v85, %v84
    %v88 = vmul.f32 %v68, %v86
    %v89 = vmul.f32 %v72, %v86
    %v90 = vmul.f32 %v76, %v86
    %v91 = vmul.f32 %v80, %v86
    %v92 = vadd.f32 %v61, %v88
    %v93 = vadd.f32 %v62, %v89
    %v94 = vadd.f32 %v63, %v90
    %v95 = vadd.f32 %v64, %v91
    %v96 = vlaneseq
    %v97 = vshrl.u32 %v96, 7
    %v98 = vsub.s32 2, %v97
    %v99 = vrot.slane %v27, %v98
    %v100 = vlaneseq
    %v101 = vshrl.u32 %v100, 7
    %v102 = vsub.s32 2, %v101
    %v103 = vrot.slane %v28, %v102
    %v104 = vlaneseq
    %v105 = vshrl.u32 %v104, 7
    %v106 = vsub.s32 2, %v105
    %v107 = vrot.slane %v29, %v106
    %v108 = vlaneseq
    %v109 = vshrl.u32 %v108, 7
    %v110 = vsub.s32 2, %v109
    %v111 = vrot.slane %v30, %v110
    %v112 = vrot.slane %v27, 2
    %v113 = vrot.slane %v28, 1
    %v114 = vsel %vm52, %v113, %v112
    %v115 = vsel %vm55, %v29, %v114
    %v116 = vrot.slane %v30, 7
    %v117 = vsel %vm58, %v116, %v115
    %v119 = vmul.f32 %v99, %v117
    %v120 = vmul.f32 %v103, %v117
    %v121 = vmul.f32 %v107, %v117
    %v122 = vmul.f32 %v111, %v117
    %v123 = vadd.f32 %v92, %v119
    %v124 = vadd.f32 %v93, %v120
    %v125 = vadd.f32 %v94, %v121
    %v126 = vadd.f32 %v95, %v122
    %v127 = vlaneseq
    %v128 = vshrl.u32 %v127, 7
    %v129 = vsub.s32 3, %v128
    %v130 = vrot.slane %v27, %v129
    %v131 = vlaneseq
    %v132 = vshrl.u32 %v131, 7
    %v133 = vsub.s32 3, %v132
    %v134 = vrot.slane %v28, %v133
    %v135 = vlaneseq
    %v136 = vshrl.u32 %v135, 7
    %v137 = vsub.s32 3, %v136
    %v138 = vrot.slane %v29, %v137
    %v139 = vlaneseq
    %v140 = vshrl.u32 %v139, 7
    %v141 = vsub.s32 3, %v140
    %v142 = vrot.slane %v30, %v141
    %v143 = vrot.slane %v27, 3
    %v144 = vrot.slane %v28, 2
    %v145 = vsel %vm52, %v144, %v143
    %v146 = vrot.slane %v29, 1
    %v147 = vsel %vm55, %v146, %v145
    %v148 = vsel %vm58, %v30, %v147
    %v150 = vmul.f32 %v130, %v148
    %v151 = vmul.f32 %v134, %v148
    %v152 = vmul.f32 %v138, %v148
    %v153 = vmul.f32 %v142, %v148
    %v154 = vadd.f32 %v123, %v150
    %v155 = vadd.f32 %v124, %v151
    %v156 = vadd.f32 %v125, %v152
    %v157 = vadd.f32 %v126, %v153
    %v158 = vsub.f32 0.0, %v154
    %v159 = vsub.f32 0.0, %v155
    %v160 = vsub.f32 0.0, %v156
    %v161 = vsub.f32 0.0, %v157
    %vm162 = vcmask 1043456
    %v163 = vsel %vm162, %v158, -inf
    %v164 = vsel %vm162, %v159, -inf
    %v165 = vsel %vm162, %v160, -inf
    %v166 = vsel %vm162, %v161, -inf
    %v167 = vmax.f32 %v163, %v164
    %v168 = vmax.f32 %v165, %v166
    %v169 = vmax.f32 %v167, %v168
    %v170 = vsub.f32 %v158, %v169
    %v171 = vsub.f32 %v159, %v169
    %v172 = vsub.f32 %v160, %v169
    %v173 = vsub.f32 %v161, %v169
    %v174 = vmul.f32 %v170, 1.442695
    %v175 = vpow.pop %v174
    %v176 = vmul.f32 %v171, 1.442695
    %v177 = vpow.pop %v176
    %v178 = vmul.f32 %v172, 1.442695
    %v179 = vpow.pop %v178
    %v180 = vmul.f32 %v173, 1.442695
    %v181 = vpow.pop %v180
    %v182 = vsel %vm162, %v175, 0.0
    %v183 = vsel %vm162, %v177, 0.0
    %v184 = vadd.f32 %v182, %v183
    %v185 = vsel %vm162, %v179, 0.0
    %v186 = vadd.f32 %v184, %v185
    %v187 = vsel %vm162, %v181, 0.0
    %v188 = vadd.f32 %v186, %v187
    %v191 = vunpack.c.l.s4 1966171168
    %v192 = vunpack.c.0.s8 %v191
    %v193 = vlaneseq
    %v194 = vshrl.u32 %v193, 7
    %v195 = vsub.s32 %v192, %v194
    %v196 = vrot.slane %v175, %v195
    %v197 = vcombine.high %v196, %v196
    %v199 = vunpack.c.l.s4 1966171168
    %v200 = vunpack.c.0.s8 %v199
    %v201 = vlaneseq
    %v202 = vshrl.u32 %v201, 7
    %v203 = vsub.s32 %v200, %v202
    %v204 = vrot.slane %v196, %v203
    %v206 = vunpack.c.l.s4 1966171168
    %v207 = vunpack.c.0.s8 %v206
    %v208 = vlaneseq
    %v209 = vshrl.u32 %v208, 7
    %v210 = vsub.s32 %v207, %v209
    %v211 = vrot.slane %v197, %v210
    %v212 = vcombine.high %v204, %v204
    %v213 = vcombine.high %v211, %v211
    %v214 = vlaneseq
    %v215 = vshrl.u32 %v214, 7
    %v216 = vsub.s32 0, %v215
    %v217 = vrot.slane %v204, %v216
    %v218 = vlaneseq
    %v219 = vshrl.u32 %v218, 7
    %v220 = vsub.s32 0, %v219
    %v221 = vrot.slane %v211, %v220
    %v222 = vlaneseq
    %v223 = vshrl.u32 %v222, 7
    %v224 = vsub.s32 0, %v223
    %v225 = vrot.slane %v212, %v224
    %v226 = vlaneseq
    %v227 = vshrl.u32 %v226, 7
    %v228 = vsub.s32 0, %v227
    %v229 = vrot.slane %v213, %v228
    %v234 = vmul.f32 %v217, %v27
    %v235 = vmul.f32 %v221, %v27
    %v236 = vmul.f32 %v225, %v27
    %v237 = vmul.f32 %v229, %v27
    %v240 = vunpack.c.l.s4 1966171168
    %v241 = vunpack.c.0.s8 %v240
    %v242 = vlaneseq
    %v243 = vshrl.u32 %v242, 7
    %v244 = vsub.s32 %v241, %v243
    %v245 = vrot.slane %v177, %v244
    %v246 = vcombine.high %v245, %v245
    %v248 = vunpack.c.l.s4 1966171168
    %v249 = vunpack.c.0.s8 %v248
    %v250 = vlaneseq
    %v251 = vshrl.u32 %v250, 7
    %v252 = vsub.s32 %v249, %v251
    %v253 = vrot.slane %v245, %v252
    %v255 = vunpack.c.l.s4 1966171168
    %v256 = vunpack.c.0.s8 %v255
    %v257 = vlaneseq
    %v258 = vshrl.u32 %v257, 7
    %v259 = vsub.s32 %v256, %v258
    %v260 = vrot.slane %v246, %v259
    %v261 = vcombine.high %v253, %v253
    %v262 = vcombine.high %v260, %v260
    %v263 = vlaneseq
    %v264 = vshrl.u32 %v263, 7
    %v265 = vsub.s32 0, %v264
    %v266 = vrot.slane %v253, %v265
    %v267 = vlaneseq
    %v268 = vshrl.u32 %v267, 7
    %v269 = vsub.s32 0, %v268
    %v270 = vrot.slane %v260, %v269
    %v271 = vlaneseq
    %v272 = vshrl.u32 %v271, 7
    %v273 = vsub.s32 0, %v272
    %v274 = vrot.slane %v261, %v273
    %v275 = vlaneseq
    %v276 = vshrl.u32 %v275, 7
    %v277 = vsub.s32 0, %v276
    %v278 = vrot.slane %v262, %v277
    %v283 = vmul.f32 %v266, %v28
    %v284 = vmul.f32 %v270, %v28
    %v285 = vmul.f32 %v274, %v28
    %v286 = vmul.f32 %v278, %v28
    %v287 = vadd.f32 %v234, %v283
    %v288 = vadd.f32 %v235, %v284
    %v289 = vadd.f32 %v236, %v285
    %v290 = vadd.f32 %v237, %v286
    %v293 = vunpack.c.l.s4 1966171168
    %v294 = vunpack.c.0.s8 %v293
    %v295 = vlaneseq
    %v296 = vshrl.u32 %v295, 7
    %v297 = vsub.s32 %v294, %v296
    %v298 = vrot.slane %v179, %v297
    %v299 = vcombine.high %v298, %v298
    %v301 = vunpack.c.l.s4 1966171168
    %v302 = vunpack.c.0.s8 %v301
    %v303 = vlaneseq
    %v304 = vshrl.u32 %v303, 7
    %v305 = vsub.s32 %v302, %v304
    %v306 = vrot.slane %v298, %v305
    %v308 = vunpack.c.l.s4 1966171168
    %v309 = vunpack.c.0.s8 %v308
    %v310 = vlaneseq
    %v311 = vshrl.u32 %v310, 7
    %v312 = vsub.s32 %v309, %v311
    %v313 = vrot.slane %v299, %v312
    %v314 = vcombine.high %v306, %v306
    %v315 = vcombine.high %v313, %v313
    %v316 = vlaneseq
    %v317 = vshrl.u32 %v316, 7
    %v318 = vsub.s32 0, %v317
    %v319 = vrot.slane %v306, %v318
    %v320 = vlaneseq
    %v321 = vshrl.u32 %v320, 7
    %v322 = vsub.s32 0, %v321
    %v323 = vrot.slane %v313, %v322
    %v324 = vlaneseq
    %v325 = vshrl.u32 %v324, 7
    %v326 = vsub.s32 0, %v325
    %v327 = vrot.slane %v314, %v326
    %v328 = vlaneseq
    %v329 = vshrl.u32 %v328, 7
    %v330 = vsub.s32 0, %v329
    %v331 = vrot.slane %v315, %v330
    %v336 = vmul.f32 %v319, %v29
    %v337 = vmul.f32 %v323, %v29
    %v338 = vmul.f32 %v327, %v29
    %v339 = vmul.f32 %v331, %v29
    %v340 = vadd.f32 %v287, %v336
    %v341 = vadd.f32 %v288, %v337
    %v342 = vadd.f32 %v289, %v338
    %v343 = vadd.f32 %v290, %v339
    %v346 = vunpack.c.l.s4 1966171168
    %v347 = vunpack.c.0.s8 %v346
    %v348 = vlaneseq
    %v349 = vshrl.u32 %v348, 7
    %v350 = vsub.s32 %v347, %v349
    %v351 = vrot.slane %v181, %v350
    %v352 = vcombine.high %v351, %v351
    %v354 = vunpack.c.l.s4 1966171168
    %v355 = vunpack.c.0.s8 %v354
    %v356 = vlaneseq
    %v357 = vshrl.u32 %v356, 7
    %v358 = vsub.s32 %v355, %v357
    %v359 = vrot.slane %v351, %v358
    %v361 = vunpack.c.l.s4 1966171168
    %v362 = vunpack.c.0.s8 %v361
    %v363 = vlaneseq
    %v364 = vshrl.u32 %v363, 7
    %v365 = vsub.s32 %v362, %v364
    %v366 = vrot.slane %v352, %v365
    %v367 = vcombine.high %v359, %v359
    %v368 = vcombine.high %v366, %v366
    %v369 = vlaneseq
    %v370 = vshrl.u32 %v369, 7
    %v371 = vsub.s32 0, %v370
    %v372 = vrot.slane %v359, %v371
    %v373 = vlaneseq
    %v374 = vshrl.u32 %v373, 7
    %v375 = vsub.s32 0, %v374
    %v376 = vrot.slane %v366, %v375
    %v377 = vlaneseq
    %v378 = vshrl.u32 %v377, 7
    %v379 = vsub.s32 0, %v378
    %v380 = vrot.slane %v367, %v379
    %v381 = vlaneseq
    %v382 = vshrl.u32 %v381, 7
    %v383 = vsub.s32 0, %v382
    %v384 = vrot.slane %v368, %v383
    %v389 = vmul.f32 %v372, %v30
    %v390 = vmul.f32 %v376, %v30
    %v391 = vmul.f32 %v380, %v30
    %v392 = vmul.f32 %v384, %v30
    %v393 = vadd.f32 %v340, %v389
    %v394 = vadd.f32 %v341, %v390
    %v395 = vadd.f32 %v342, %v391
    %v396 = vadd.f32 %v343, %v392
    %v397 = vrcp.pop %v188
    %v398 = vmul.f32 %v188, %v397
    %v399 = vsub.f32 2.0, %v398
    %v400 = vmul.f32 %v397, %v399
    %s401 = sld [smem:[#allocation2]]
    %s402 = sadd.f32 %s401, 1.0
    %v403 = vstv %s402
    %v404 = vmul.f32 %v403, %v400
    %v407 = vunpack.c.l.s4 1966171168
    %v408 = vunpack.c.0.s8 %v407
    %v409 = vlaneseq
    %v410 = vshrl.u32 %v409, 7
    %v411 = vsub.s32 %v408, %v410
    %v412 = vrot.slane %v404, %v411
    %v413 = vcombine.high %v412, %v412
    %v415 = vunpack.c.l.s4 1966171168
    %v416 = vunpack.c.0.s8 %v415
    %v417 = vlaneseq
    %v418 = vshrl.u32 %v417, 7
    %v419 = vsub.s32 %v416, %v418
    %v420 = vrot.slane %v412, %v419
    %v422 = vunpack.c.l.s4 1966171168
    %v423 = vunpack.c.0.s8 %v422
    %v424 = vlaneseq
    %v425 = vshrl.u32 %v424, 7
    %v426 = vsub.s32 %v423, %v425
    %v427 = vrot.slane %v413, %v426
    %v428 = vcombine.high %v420, %v420
    %v429 = vcombine.high %v427, %v427
    %v430 = vlaneseq
    %v431 = vshrl.u32 %v430, 7
    %v432 = vsub.s32 0, %v431
    %v433 = vrot.slane %v420, %v432
    %v434 = vlaneseq
    %v435 = vshrl.u32 %v434, 7
    %v436 = vsub.s32 0, %v435
    %v437 = vrot.slane %v427, %v436
    %v438 = vlaneseq
    %v439 = vshrl.u32 %v438, 7
    %v440 = vsub.s32 0, %v439
    %v441 = vrot.slane %v428, %v440
    %v442 = vlaneseq
    %v443 = vshrl.u32 %v442, 7
    %v444 = vsub.s32 0, %v443
    %v445 = vrot.slane %v429, %v444
    %v450 = vmul.f32 %v393, %v433
    %v451 = vmul.f32 %v394, %v437
    %v452 = vmul.f32 %v395, %v441
    %v453 = vmul.f32 %v396, %v445
    %454 = vst [vmem:[#allocation6] sm:$0xf] %v450
    %455 = vst [vmem:[#allocation6 + $0x4] sm:$0xf] %v451
    %456 = vst [vmem:[#allocation6 + $0x8] sm:$0xf] %v452
    %457 = vst [vmem:[#allocation6 + $0xc] sm:$0xf] %v453
    // Predicated region
    $region14: #{tpu_custom_call.1} parent=1 // pred_check
      _
    $region15: #{tpu_custom_call.1} parent=1 // pred_check_branch
      %459 = sbr.rel (0) target = $region17
    $region16: #{tpu_custom_call.1} parent=1 // pred_region
      %s461 = ssub.s32 256, 256
      %462 = vsyncadd [#allocation5], %s461
      %s463 = sshll.u32 [#allocation6], 4
      %s464 = int_to_ptr.vmem [resolvable:$true] %s463
      %469 = dma.vmem_to_hbm [thread:$0]  %s464, 256, %s2, [#allocation5], 64, 64, 4
    $region17: #{tpu_custom_call.1} parent=1 // pred_fallthru
      _
    // Predicated region
    $region18: #{tpu_custom_call.1} parent=1 // pred_check
      _
    $region19: #{tpu_custom_call.1} parent=1 // pred_check_branch
      %471 = sbr.rel (0) target = $region21
    $region20: #{tpu_custom_call.1} parent=1 // pred_region
      %472 = dma.done [#allocation5], 256
    $region21: #{tpu_custom_call.1} parent=1 // pred_fallthru
      _
    %473 = vsyncpa [#allocation4], 1
    %474 = vsyncpa [#allocation5], 1

</llo_original>
